<compile_context>
chip_gen: v7x
topology: tpu7x:2x2x1
jax: 0.10.0
libtpu: 0.0.40
codegen_flags: <defaults>
</compile_context>

<pallas_src>
import math

import jax
import jax.numpy as jnp
from jax.experimental import pallas as pl
from jax.experimental.pallas import tpu as pltpu


def _round_up(x, m):
    return ((x + m - 1) // m) * m


def _cdiv(a, b):
    return -(-a // b)


def critic_kernel(state_ref, action_ref, w1s_ref, w1a_ref, b1_ref,
                  w2_ref, b2_ref, w3_ref, b3_ref, o_ref):
    # fp32 tiles streamed from HBM; bf16 cast happens on the VPU (nearly free).
    s = state_ref[...].astype(jnp.bfloat16)
    a = action_ref[...].astype(jnp.bfloat16)

    # Layer 1: concat fused away -> two bf16 matmuls, fp32 accumulate.
    h1 = (
        jnp.dot(s, w1s_ref[...], preferred_element_type=jnp.float32)
        + jnp.dot(a, w1a_ref[...], preferred_element_type=jnp.float32)
        + b1_ref[...]
    )
    h1 = jnp.maximum(h1, 0.0)

    # Layer 2: bf16 matmul, fp32 accumulate.
    h2 = (
        jnp.dot(h1.astype(jnp.bfloat16), w2_ref[...],
                preferred_element_type=jnp.float32)
        + b2_ref[...]
    )
    h2 = jnp.maximum(h2, 0.0)

    # Output layer on the MXU: 1-wide bf16 dot, fp32 accumulate, SMEM scalar bias.
    q = (
        jnp.dot(h2.astype(jnp.bfloat16), w3_ref[...],
                preferred_element_type=jnp.float32)
        + b3_ref[0, 0]
    )
    o_ref[...] = q.astype(o_ref.dtype)


def prepare_critic_params(params, state_dim):
    """Pad / split / cast the weights once so repeated forward calls reuse them.

    params: (w1, b1, w2, b2, w3, b3) with wN stored as [in, out], bN as [1, out]
            (i.e. x @ W + b, equivalent to PyTorch's x @ W.T + b).
    """
    w1, b1, w2, b2, w3, b3 = params
    h1_dim, h2_dim = w1.shape[1], w2.shape[1]
    h1p, h2p = _round_up(h1_dim, 128), _round_up(h2_dim, 128)

    def pad_cols(arr, n):
        return jnp.pad(arr, ((0, 0), (0, n - arr.shape[1])))

    # Split W1 so the concat([state, action]) disappears.
    w1s_p = pad_cols(w1[:state_dim], h1p).astype(jnp.bfloat16)
    w1a_p = pad_cols(w1[state_dim:], h1p).astype(jnp.bfloat16)
    b1_p = pad_cols(b1.astype(jnp.float32), h1p)
    w2_p = jnp.pad(w2, ((0, h1p - h1_dim), (0, h2p - h2_dim))).astype(jnp.bfloat16)
    b2_p = pad_cols(b2.astype(jnp.float32), h2p)
    w3_col = jnp.pad(w3, ((0, h2p - h2_dim), (0, 0))).astype(jnp.bfloat16)  # [h2p, 1]
    b3_s = b3.reshape(1, 1).astype(jnp.float32)
    return (w1s_p, w1a_p, b1_p, w2_p, b2_p, w3_col, b3_s)


def _batch_partition(B, batch_tile):
    """Pick (tile, padded_batch): tile is a multiple of 8, and when B > 8 the
    grid has an even number (>= 2) of steps so both v7x TensorCores stay busy."""
    cap = max(8, _round_up(batch_tile, 8))
    n_tiles = _cdiv(B, cap)
    if B > 8:
        n_tiles = max(2, n_tiles)
    if n_tiles > 1 and n_tiles % 2:
        n_tiles += 1
    tb = _round_up(_cdiv(B, n_tiles), 8)
    return tb, tb * n_tiles


def critic_forward(state, action, prepared_params, *, batch_tile=2048):
    """Pallas forward pass for Network_Critic.

    state:  [B, state_dim]  float32
    action: [B, action_dim] float32
    prepared_params: output of prepare_critic_params
    returns [B, 1] float32
    """
    w1s_p, w1a_p, b1_p, w2_p, b2_p, w3_col, b3_s = prepared_params
    B, state_dim = state.shape
    action_dim = action.shape[1]
    h1p = w1s_p.shape[1]
    h2p = w2_p.shape[1]

    tb, b_pad = _batch_partition(B, batch_tile)
    state_p = state.astype(jnp.float32)
    action_p = action.astype(jnp.float32)
    if b_pad != B:
        state_p = jnp.pad(state_p, ((0, b_pad - B), (0, 0)))
        action_p = jnp.pad(action_p, ((0, b_pad - B), (0, 0)))

    def resident(shape):
        # Constant index map -> weight stays VMEM-resident across grid steps.
        return pl.BlockSpec(shape, lambda i: (0,) * len(shape))

    out = pl.pallas_call(
        critic_kernel,
        out_shape=jax.ShapeDtypeStruct((b_pad, 1), jnp.float32),
        grid=(b_pad // tb,),
        in_specs=[
            pl.BlockSpec((tb, state_dim), lambda i: (i, 0)),    # state tile (fp32)
            pl.BlockSpec((tb, action_dim), lambda i: (i, 0)),   # action tile (fp32)
            resident((state_dim, h1p)),                         # W1_state (bf16)
            resident((action_dim, h1p)),                        # W1_action (bf16)
            resident((1, h1p)),                                 # b1 (fp32)
            resident((h1p, h2p)),                               # W2 (bf16)
            resident((1, h2p)),                                 # b2 (fp32)
            resident((h2p, 1)),                                 # w3 column (bf16)
            pl.BlockSpec(memory_space=pltpu.MemorySpace.SMEM),  # b3 scalar
        ],
        out_specs=pl.BlockSpec((tb, 1), lambda i: (i, 0)),
        compiler_params=pltpu.CompilerParams(
            dimension_semantics=("parallel",),
            vmem_limit_bytes=32 * 1024 * 1024,
        ),
    )(state_p, action_p, w1s_p, w1a_p, b1_p, w2_p, b2_p, w3_col, b3_s)

    return out[:B]


def init_critic_params(key, state_dim, action_dim, hidden_dims=(400, 300)):
    """Deterministic init mimicking PyTorch nn.Linear default (uniform ±1/sqrt(fan_in))."""
    dims = [state_dim + action_dim] + list(hidden_dims) + [1]
    params = []
    for i in range(len(dims) - 1):
        fan_in, fan_out = dims[i], dims[i + 1]
        key, kw, kb = jax.random.split(key, 3)
        bound = 1.0 / math.sqrt(fan_in)
        w = jax.random.uniform(
            kw, (fan_in, fan_out), jnp.float32, minval=-bound, maxval=bound
        )
        b = jax.random.uniform(
            kb, (1, fan_out), jnp.float32, minval=-bound, maxval=bound
        )
        params.extend([w, b])
    return tuple(params)


def reference_forward_fp32(state, action, params):
    """Plain-JAX fp32 reference identical to the PyTorch module semantics."""
    x = jnp.concatenate([state, action], axis=1)
    w1, b1, w2, b2, w3, b3 = params
    x = jnp.maximum(x @ w1 + b1, 0.0)
    x = jnp.maximum(x @ w2 + b2, 0.0)
    return x @ w3 + b3


def reference_forward_mixed(state, action, params):
    """Reference with the same bf16-mul / fp32-accumulate precision as the kernel."""
    w1, b1, w2, b2, w3, b3 = params
    x = jnp.concatenate([state, action], axis=1).astype(jnp.bfloat16)
    h1 = jnp.dot(x, w1.astype(jnp.bfloat16),
                 preferred_element_type=jnp.float32) + b1
    h1 = jnp.maximum(h1, 0.0)
    h2 = jnp.dot(h1.astype(jnp.bfloat16), w2.astype(jnp.bfloat16),
                 preferred_element_type=jnp.float32) + b2
    h2 = jnp.maximum(h2, 0.0)
    return jnp.dot(h2.astype(jnp.bfloat16), w3.astype(jnp.bfloat16),
                   preferred_element_type=jnp.float32) + b3


if __name__ == "__main__":
    # Small, module-consistent shapes.
    B, STATE_DIM, ACTION_DIM = 8, 16, 8
    HIDDEN = (64, 32)

    key = jax.random.PRNGKey(0)
    k_state, k_action, k_params, k_state2, k_action2 = jax.random.split(key, 5)

    params = init_critic_params(k_params, STATE_DIM, ACTION_DIM, HIDDEN)
    prepared = prepare_critic_params(params, STATE_DIM)   # prepared once, reused

    # --- single-tile path ----------------------------------------------------
    state = jax.random.normal(k_state, (B, STATE_DIM), jnp.float32)
    action = jax.random.normal(k_action, (B, ACTION_DIM), jnp.float32)

    q = jax.block_until_ready(critic_forward(state, action, prepared))
    assert q.shape == (B, 1)

    q_mixed = reference_forward_mixed(state, action, params)
    assert jnp.allclose(q, q_mixed, atol=1e-3, rtol=1e-3), "mismatch vs mixed ref"
    q_fp32 = reference_forward_fp32(state, action, params)
    assert jnp.allclose(q, q_fp32, atol=5e-2, rtol=5e-2), "mismatch vs fp32 ref"

    # --- multi-tile path (2 parallel grid steps, batch padding exercised) -----
    B2 = 48
    state2 = jax.random.normal(k_state2, (B2, STATE_DIM), jnp.float32)
    action2 = jax.random.normal(k_action2, (B2, ACTION_DIM), jnp.float32)

    q2 = jax.block_until_ready(critic_forward(state2, action2, prepared))
    assert q2.shape == (B2, 1)

    q2_mixed = reference_forward_mixed(state2, action2, params)
    assert jnp.allclose(q2, q2_mixed, atol=1e-3, rtol=1e-3), "mismatch vs mixed ref (tiled)"
    q2_fp32 = reference_forward_fp32(state2, action2, params)
    assert jnp.allclose(q2, q2_fp32, atol=5e-2, rtol=5e-2), "mismatch vs fp32 ref (tiled)"

    print("KERNEL_OK")
</pallas_src>

<mosaic_0001>
module attributes {stable_mosaic.version = 11 : i64} {
  func.func @critic_kernel(%arg0: i32, %arg1: memref<8x16xf32, #tpu.memory_space<vmem>>, %arg2: memref<8x8xf32, #tpu.memory_space<vmem>>, %arg3: memref<16x128xbf16, #tpu.memory_space<vmem>>, %arg4: memref<8x128xbf16, #tpu.memory_space<vmem>>, %arg5: memref<1x128xf32, #tpu.memory_space<vmem>>, %arg6: memref<128x128xbf16, #tpu.memory_space<vmem>>, %arg7: memref<1x128xf32, #tpu.memory_space<vmem>>, %arg8: memref<128x1xbf16, #tpu.memory_space<vmem>>, %arg9: memref<1x1xf32, #tpu.memory_space<smem>>, %arg10: memref<8x1xf32, #tpu.memory_space<vmem>>) attributes {dimension_semantics = [#tpu.dimension_semantics<parallel>], iteration_bounds = array<i64: 1>, scalar_prefetch = 0 : i64, scratch_operands = 0 : i64, tpu.core_type = #tpu.core_type<tc>, window_params = [{transform_indices = @transform_0, window_bounds = array<i64: 8, 16>}, {transform_indices = @transform_1, window_bounds = array<i64: 8, 8>}, {pipeline_mode = #tpu.pipeline_mode<synchronous>, transform_indices = @transform_2, window_bounds = array<i64: 16, 128>}, {pipeline_mode = #tpu.pipeline_mode<synchronous>, transform_indices = @transform_3, window_bounds = array<i64: 8, 128>}, {pipeline_mode = #tpu.pipeline_mode<synchronous>, transform_indices = @transform_4, window_bounds = array<i64: 1, 128>}, {pipeline_mode = #tpu.pipeline_mode<synchronous>, transform_indices = @transform_5, window_bounds = array<i64: 128, 128>}, {pipeline_mode = #tpu.pipeline_mode<synchronous>, transform_indices = @transform_6, window_bounds = array<i64: 1, 128>}, {pipeline_mode = #tpu.pipeline_mode<synchronous>, transform_indices = @transform_7, window_bounds = array<i64: 128, 1>}, {transform_indices = @transform_8, window_bounds = array<i64: 1, 1>}, {transform_indices = @transform_9, window_bounds = array<i64: 8, 1>}]} {
    %c0 = arith.constant 0 : index
    %c0_0 = arith.constant 0 : index
    %0 = vector.load %arg1[%c0, %c0_0] : memref<8x16xf32, #tpu.memory_space<vmem>>, vector<8x16xf32>
    %1 = arith.truncf %0 : vector<8x16xf32> to vector<8x16xbf16>
    %c0_1 = arith.constant 0 : index
    %c0_2 = arith.constant 0 : index
    %2 = vector.load %arg2[%c0_1, %c0_2] : memref<8x8xf32, #tpu.memory_space<vmem>>, vector<8x8xf32>
    %3 = arith.truncf %2 : vector<8x8xf32> to vector<8x8xbf16>
    %c0_3 = arith.constant 0 : index
    %c0_4 = arith.constant 0 : index
    %4 = vector.load %arg3[%c0_3, %c0_4] : memref<16x128xbf16, #tpu.memory_space<vmem>>, vector<16x128xbf16>
    %cst = arith.constant dense<0.000000e+00> : vector<8x128xf32>
    %5 = tpu.matmul %1, %4, %cst {dimension_numbers = #tpu.dot_dimension_numbers<[1], [0], [0], [1], [0, 0, 1, 1], [], []>} : vector<8x16xbf16>, vector<16x128xbf16>, vector<8x128xf32> -> vector<8x128xf32>
    %c0_5 = arith.constant 0 : index
    %c0_6 = arith.constant 0 : index
    %6 = vector.load %arg4[%c0_5, %c0_6] : memref<8x128xbf16, #tpu.memory_space<vmem>>, vector<8x128xbf16>
    %cst_7 = arith.constant dense<0.000000e+00> : vector<8x128xf32>
    %7 = tpu.matmul %3, %6, %cst_7 {dimension_numbers = #tpu.dot_dimension_numbers<[1], [0], [0], [1], [0, 0, 1, 1], [], []>} : vector<8x8xbf16>, vector<8x128xbf16>, vector<8x128xf32> -> vector<8x128xf32>
    %8 = arith.addf %5, %7 : vector<8x128xf32>
    %c0_8 = arith.constant 0 : index
    %c0_9 = arith.constant 0 : index
    %9 = vector.load %arg5[%c0_8, %c0_9] : memref<1x128xf32, #tpu.memory_space<vmem>>, vector<1x128xf32>
    %10 = vector.broadcast %9 : vector<1x128xf32> to vector<8x128xf32>
    %11 = arith.addf %8, %10 : vector<8x128xf32>
    %cst_10 = arith.constant 0.000000e+00 : f32
    %12 = vector.broadcast %cst_10 : f32 to vector<8x128xf32>
    %13 = arith.maximumf %11, %12 : vector<8x128xf32>
    %14 = arith.truncf %13 : vector<8x128xf32> to vector<8x128xbf16>
    %c0_11 = arith.constant 0 : index
    %c0_12 = arith.constant 0 : index
    %15 = vector.load %arg6[%c0_11, %c0_12] : memref<128x128xbf16, #tpu.memory_space<vmem>>, vector<128x128xbf16>
    %cst_13 = arith.constant dense<0.000000e+00> : vector<8x128xf32>
    %16 = tpu.matmul %14, %15, %cst_13 {dimension_numbers = #tpu.dot_dimension_numbers<[1], [0], [0], [1], [0, 0, 1, 1], [], []>} : vector<8x128xbf16>, vector<128x128xbf16>, vector<8x128xf32> -> vector<8x128xf32>
    %c0_14 = arith.constant 0 : index
    %c0_15 = arith.constant 0 : index
    %17 = vector.load %arg7[%c0_14, %c0_15] : memref<1x128xf32, #tpu.memory_space<vmem>>, vector<1x128xf32>
    %18 = vector.broadcast %17 : vector<1x128xf32> to vector<8x128xf32>
    %19 = arith.addf %16, %18 : vector<8x128xf32>
    %cst_16 = arith.constant 0.000000e+00 : f32
    %20 = vector.broadcast %cst_16 : f32 to vector<8x128xf32>
    %21 = arith.maximumf %19, %20 : vector<8x128xf32>
    %22 = arith.truncf %21 : vector<8x128xf32> to vector<8x128xbf16>
    %c0_17 = arith.constant 0 : index
    %c0_18 = arith.constant 0 : index
    %23 = vector.load %arg8[%c0_17, %c0_18] : memref<128x1xbf16, #tpu.memory_space<vmem>>, vector<128x1xbf16>
    %cst_19 = arith.constant dense<0.000000e+00> : vector<8x1xf32>
    %24 = tpu.matmul %22, %23, %cst_19 {dimension_numbers = #tpu.dot_dimension_numbers<[1], [0], [0], [1], [0, 0, 1, 1], [], []>} : vector<8x128xbf16>, vector<128x1xbf16>, vector<8x1xf32> -> vector<8x1xf32>
    %c0_20 = arith.constant 0 : index
    %c0_21 = arith.constant 0 : index
    %25 = memref.load %arg9[%c0_20, %c0_21] : memref<1x1xf32, #tpu.memory_space<smem>>
    %26 = vector.broadcast %25 : f32 to vector<8x1xf32>
    %27 = arith.addf %24, %26 : vector<8x1xf32>
    %c0_22 = arith.constant 0 : index
    %c0_23 = arith.constant 0 : index
    %28 = vector.load %arg10[%c0_22, %c0_23] : memref<8x1xf32, #tpu.memory_space<vmem>>, vector<8x1xf32>
    tpu.vector_store %arg10[%c0_22, %c0_23], %27 {strides = array<i32>} : memref<8x1xf32, #tpu.memory_space<vmem>>, vector<8x1xf32>,
    return
  }
  func.func @transform_0(%arg0: i32) -> (i32, i32) {
    %c0_i32 = arith.constant 0 : i32
    %c0_i32_0 = arith.constant 0 : i32
    return %arg0, %c0_i32 : i32, i32
  }
  func.func @transform_1(%arg0: i32) -> (i32, i32) {
    %c0_i32 = arith.constant 0 : i32
    %c0_i32_0 = arith.constant 0 : i32
    return %arg0, %c0_i32 : i32, i32
  }
  func.func @transform_2(%arg0: i32) -> (i32, i32) {
    %c0_i32 = arith.constant 0 : i32
    %c0_i32_0 = arith.constant 0 : i32
    %c0_i32_1 = arith.constant 0 : i32
    return %c0_i32, %c0_i32_0 : i32, i32
  }
  func.func @transform_3(%arg0: i32) -> (i32, i32) {
    %c0_i32 = arith.constant 0 : i32
    %c0_i32_0 = arith.constant 0 : i32
    %c0_i32_1 = arith.constant 0 : i32
    return %c0_i32, %c0_i32_0 : i32, i32
  }
  func.func @transform_4(%arg0: i32) -> (i32, i32) {
    %c0_i32 = arith.constant 0 : i32
    %c0_i32_0 = arith.constant 0 : i32
    %c0_i32_1 = arith.constant 0 : i32
    return %c0_i32, %c0_i32_0 : i32, i32
  }
  func.func @transform_5(%arg0: i32) -> (i32, i32) {
    %c0_i32 = arith.constant 0 : i32
    %c0_i32_0 = arith.constant 0 : i32
    %c0_i32_1 = arith.constant 0 : i32
    return %c0_i32, %c0_i32_0 : i32, i32
  }
  func.func @transform_6(%arg0: i32) -> (i32, i32) {
    %c0_i32 = arith.constant 0 : i32
    %c0_i32_0 = arith.constant 0 : i32
    %c0_i32_1 = arith.constant 0 : i32
    return %c0_i32, %c0_i32_0 : i32, i32
  }
  func.func @transform_7(%arg0: i32) -> (i32, i32) {
    %c0_i32 = arith.constant 0 : i32
    %c0_i32_0 = arith.constant 0 : i32
    %c0_i32_1 = arith.constant 0 : i32
    return %c0_i32, %c0_i32_0 : i32, i32
  }
  func.func @transform_8(%arg0: i32) -> (i32, i32) {
    %c0_i32 = arith.constant 0 : i32
    %c0_i32_0 = arith.constant 0 : i32
    %c0_i32_1 = arith.constant 0 : i32
    return %c0_i32, %c0_i32_0 : i32, i32
  }
  func.func @transform_9(%arg0: i32) -> (i32, i32) {
    %c0_i32 = arith.constant 0 : i32
    %c0_i32_0 = arith.constant 0 : i32
    return %arg0, %c0_i32 : i32, i32
  }
}

</mosaic_0001>

<llo_original>
// kernel: tpu_custom_call.1
$region0: #{tpu_custom_call.1}
  #allocation0 [shape = 'u32[]', space=smem, size = 0x4, offset = 0x4, fixed_abs, tag = 'smem constant byte address 0x4 - core index']
  #allocation1 [shape = 'u32[144,128]{1,0:T(1,128)}', space=vmem, size = 0x12000, scoped, tag = 'internal scratch']
  #allocation2 [shape = 'f32[1,1]{1,0:T(1,128)S(6)}', space=smem, size = 0x200, scoped, tag = 'scoped memory for tpu_custom_call.1']
  %s0 = inlined_call_operand.vmem [shape: f32[8,16], index: 0, kind: input, shape index: {}]
  %s1 = inlined_call_operand.vmem [shape: f32[8,8], index: 1, kind: input, shape index: {}]
  %s2 = inlined_call_operand.hbm [shape: bf16[16,128], index: 2, kind: input, shape index: {}]
  %s3 = inlined_call_operand.vmem [shape: bf16[8,128], index: 3, kind: input, shape index: {}]
  %s4 = inlined_call_operand.vmem [shape: f32[1,128], index: 4, kind: input, shape index: {}]
  %s5 = inlined_call_operand.vmem [shape: bf16[128,128], index: 5, kind: input, shape index: {}]
  %s6 = inlined_call_operand.vmem [shape: f32[1,128], index: 6, kind: input, shape index: {}]
  %s7 = inlined_call_operand.vmem [shape: bf16[128,1], index: 7, kind: input, shape index: {}]
  %s8 = inlined_call_operand.<no memory space> [shape: f32[1,1], index: 8, kind: input, shape index: {}]
  %s9 = inlined_call_operand.vmem [shape: f32[8,1], index: 9, kind: output, shape index: {}]
  %s10 = sld [smem:[#allocation0]]
  $region50: #{tpu_custom_call.1} parent=0
    _
  %s12 = ssub.s32 1, %s10
  %s13 = scalar_select 0, %s12, %s10
  %14 = sst [smem:[#allocation2]] %s8
  $region1: #{tpu_custom_call.1} parent=0
    #allocation3 [shape = 'u8[4096]{0}', space=vmem, size = 0x1000, scoped, tag = 'input window, operand 2, single buffered']
    #allocation4 [shape = 's32[1]{0}', space=sflag, size = 0x4, scoped, tag = 'scoped memory for tpu_custom_call.1']
    %15 = vsyncpa [#allocation4], 0
    // Predicated region
    $region2: #{tpu_custom_call.1} parent=1 // pred_check
      _
    $region3: #{tpu_custom_call.1} parent=1 // pred_check_branch
      %17 = sbr.rel (0) target = $region5
    $region4: #{tpu_custom_call.1} parent=1 // pred_region
      _
    $region5: #{tpu_custom_call.1} parent=1 // pred_fallthru
      _
    // Predicated region
    $region6: #{tpu_custom_call.1} parent=1 // pred_check
      _
    $region7: #{tpu_custom_call.1} parent=1 // pred_check_branch
      %19 = sbr.rel (0) target = $region9
    $region8: #{tpu_custom_call.1} parent=1 // pred_region
      _
    $region9: #{tpu_custom_call.1} parent=1 // pred_fallthru
      _
    // Predicated region
    $region10: #{tpu_custom_call.1} parent=1 // pred_check
      _
    $region11: #{tpu_custom_call.1} parent=1 // pred_check_branch
      %21 = sbr.rel (0) target = $region13
    $region12: #{tpu_custom_call.1} parent=1 // pred_region
      %s23 = ssub.s32 128, 128
      %24 = vsyncadd [#allocation4], %s23
      %s25 = sshll.u32 [#allocation3], 4
      %s26 = int_to_ptr.vmem [resolvable:$true] %s25
      %31 = dma.hbm_to_vmem [thread:$0]  %s2, 128, %s26, [#allocation4], 64, 64, 4
    $region13: #{tpu_custom_call.1} parent=1 // pred_fallthru
      _
    // Predicated region
    $region14: #{tpu_custom_call.1} parent=1 // pred_check
      _
    $region15: #{tpu_custom_call.1} parent=1 // pred_check_branch
      %33 = sbr.rel (0) target = $region17
    $region16: #{tpu_custom_call.1} parent=1 // pred_region
      _
    $region17: #{tpu_custom_call.1} parent=1 // pred_fallthru
      _
    // Predicated region
    $region18: #{tpu_custom_call.1} parent=1 // pred_check
      _
    $region19: #{tpu_custom_call.1} parent=1 // pred_check_branch
      %35 = sbr.rel (0) target = $region21
    $region20: #{tpu_custom_call.1} parent=1 // pred_region
      _
    $region21: #{tpu_custom_call.1} parent=1 // pred_fallthru
      _
    // Predicated region
    $region22: #{tpu_custom_call.1} parent=1 // pred_check
      _
    $region23: #{tpu_custom_call.1} parent=1 // pred_check_branch
      %37 = sbr.rel (0) target = $region25
    $region24: #{tpu_custom_call.1} parent=1 // pred_region
      _
    $region25: #{tpu_custom_call.1} parent=1 // pred_fallthru
      _
    // Predicated region
    $region26: #{tpu_custom_call.1} parent=1 // pred_check
      _
    $region27: #{tpu_custom_call.1} parent=1 // pred_check_branch
      %39 = sbr.rel (0) target = $region29
    $region28: #{tpu_custom_call.1} parent=1 // pred_region
      _
    $region29: #{tpu_custom_call.1} parent=1 // pred_fallthru
      _
    // Predicated region
    $region30: #{tpu_custom_call.1} parent=1 // pred_check
      _
    $region31: #{tpu_custom_call.1} parent=1 // pred_check_branch
      %41 = sbr.rel (0) target = $region33
    $region32: #{tpu_custom_call.1} parent=1 // pred_region
      _
    $region33: #{tpu_custom_call.1} parent=1 // pred_fallthru
      _
    // Predicated region
    $region34: #{tpu_custom_call.1} parent=1 // pred_check
      _
    $region35: #{tpu_custom_call.1} parent=1 // pred_check_branch
      %43 = sbr.rel (0) target = $region37
    $region36: #{tpu_custom_call.1} parent=1 // pred_region
      _
    $region37: #{tpu_custom_call.1} parent=1 // pred_fallthru
      _
    // Predicated region
    $region38: #{tpu_custom_call.1} parent=1 // pred_check
      _
    $region39: #{tpu_custom_call.1} parent=1 // pred_check_branch
      %45 = sbr.rel (0) target = $region41
    $region40: #{tpu_custom_call.1} parent=1 // pred_region
      %46 = dma.done [#allocation4], 128
    $region41: #{tpu_custom_call.1} parent=1 // pred_fallthru
      _
    %v48 = vld [vmem:[%s0] sm:$0xff]
    %v49 = vpack.c.bf16 %v48, %v48
    %v50 = vld [vmem:[%s1] sm:$0xff]
    %v51 = vpack.c.bf16 %v50, %v50
    %v52 = vld [vmem:[#allocation3] sm:$0xf]
    %v53 = vld [vmem:[#allocation3 + $0x4] sm:$0xf]
    %v54 = vld [vmem:[%s3] sm:$0xf]
    %vm55 = vcmask 64512
    %v57 = vsel %vm55, %v51, 0
    %vm59 = vcmask 1043456
    %v61 = vsel %vm59, %v54, 0
    %63 = vmatprep.subr.bf16.mxu0 0
    %64 = vmatpush1.bf16.msra.mxu0 %v61
    %65 = vmatprep.subr.bf16.mxu0 0
    %66 = vmatpush1.bf16.msra.mxu0 0
    %67 = vmatprep.subr.bf16.mxu0 0
    %68 = vmatpush1.bf16.msra.mxu0 0
    %69 = vmatprep.subr.bf16.mxu0 0
    %70 = vmatpush1.bf16.msra.mxu0 0
    %71 = vmatprep.subr.bf16.mxu0 0
    %72 = vmatpush1.bf16.msra.mxu0 0
    %73 = vmatprep.subr.bf16.mxu0 0
    %74 = vmatpush1.bf16.msra.mxu0 0
    %75 = vmatprep.subr.bf16.mxu0 0
    %76 = vmatpush1.bf16.msra.mxu0 0
    %77 = vmatprep.subr.bf16.mxu0 0
    %78 = vmatpush1.bf16.msra.mxu0 0
    %79 = vmatprep.subr.bf16.mxu0 0
    %80 = vmatpush1.bf16.msra.mxu0 0
    %81 = vmatprep.subr.bf16.mxu0 0
    %82 = vmatpush1.bf16.msra.mxu0 0
    %83 = vmatprep.subr.bf16.mxu0 0
    %84 = vmatpush1.bf16.msra.mxu0 0
    %85 = vmatprep.subr.bf16.mxu0 0
    %86 = vmatpush1.bf16.msra.mxu0 0
    %87 = vmatprep.subr.bf16.mxu0 0
    %88 = vmatpush1.bf16.msra.mxu0 0
    %89 = vmatprep.subr.bf16.mxu0 0
    %90 = vmatpush1.bf16.msra.mxu0 0
    %91 = vmatprep.subr.bf16.mxu0 0
    %92 = vmatpush1.bf16.msra.mxu0 0
    %93 = vmatprep.subr.bf16.mxu0 0
    %94 = vmatpush1.bf16.msra.mxu0 0
    %95 = vmatprep.mubr.bf16.mxu0 0
    %96 = vmatmul.mubr.bf16.gmra.mrb[0].mxu0 %v57
    %v97 = vpop.f32.mrb[0].mxu0
    %v98 = vadd.f32 0.0, %v97
    %v99 = vpop.f32.mrb[0].mxu0
    %v100 = vpop.f32.mrb[0].mxu0
    %v101 = vpop.f32.mrb[0].mxu0
    %102 = vdwg.mxu0
    %v105 = vunpack.c.l.b16 %v52
    %v106 = vunpack.c.l.b16 %v53
    %v107 = vpack.c.b16 %v106, %v105
    %vm109 = vcmask 130048
    %v111 = vsel %vm109, %v49, 0
    %113 = vmatprep.subr.bf16.mxu0 0
    %114 = vmatpush1.bf16.msra.mxu0 %v107
    %115 = vmatprep.subr.bf16.mxu0 0
    %116 = vmatpush1.bf16.msra.mxu0 0
    %117 = vmatprep.subr.bf16.mxu0 0
    %118 = vmatpush1.bf16.msra.mxu0 0
    %119 = vmatprep.subr.bf16.mxu0 0
    %120 = vmatpush1.bf16.msra.mxu0 0
    %121 = vmatprep.subr.bf16.mxu0 0
    %122 = vmatpush1.bf16.msra.mxu0 0
    %123 = vmatprep.subr.bf16.mxu0 0
    %124 = vmatpush1.bf16.msra.mxu0 0
    %125 = vmatprep.subr.bf16.mxu0 0
    %126 = vmatpush1.bf16.msra.mxu0 0
    %127 = vmatprep.subr.bf16.mxu0 0
    %128 = vmatpush1.bf16.msra.mxu0 0
    %129 = vmatprep.subr.bf16.mxu0 0
    %130 = vmatpush1.bf16.msra.mxu0 0
    %131 = vmatprep.subr.bf16.mxu0 0
    %132 = vmatpush1.bf16.msra.mxu0 0
    %133 = vmatprep.subr.bf16.mxu0 0
    %134 = vmatpush1.bf16.msra.mxu0 0
    %135 = vmatprep.subr.bf16.mxu0 0
    %136 = vmatpush1.bf16.msra.mxu0 0
    %137 = vmatprep.subr.bf16.mxu0 0
    %138 = vmatpush1.bf16.msra.mxu0 0
    %139 = vmatprep.subr.bf16.mxu0 0
    %140 = vmatpush1.bf16.msra.mxu0 0
    %141 = vmatprep.subr.bf16.mxu0 0
    %142 = vmatpush1.bf16.msra.mxu0 0
    %143 = vmatprep.subr.bf16.mxu0 0
    %144 = vmatpush1.bf16.msra.mxu0 0
    %145 = vmatprep.mubr.bf16.mxu0 0
    %146 = vmatmul.mubr.bf16.gmra.mrb[0].mxu0 %v111
    %v147 = vpop.f32.mrb[0].mxu0
    %v148 = vadd.f32 %v98, %v147
    %v149 = vpop.f32.mrb[0].mxu0
    %v150 = vpop.f32.mrb[0].mxu0
    %v151 = vpop.f32.mrb[0].mxu0
    %152 = vdwg.mxu0
    %v153 = vld [vmem:[%s4] sm:$0x1]
    %v155 = vlaneseq
    %v156 = vshrl.u32 %v155, 7
    %v157 = vsub.s32 0, %v156
    %v158 = vrot.slane %v153, %v157
    %v160 = vadd.f32 %v148, %v158
    %v161 = vmax.f32 %v160, 0.0
    %v162 = vpack.c.bf16 %v161, %v161
    %v163 = vld [vmem:[%s5] sm:$0xf]
    %v164 = vld [vmem:[%s5 + $0x4] sm:$0xf]
    %v165 = vld [vmem:[%s5 + $0x8] sm:$0xf]
    %v166 = vld [vmem:[%s5 + $0xc] sm:$0xf]
    %v167 = vld [vmem:[%s5 + $0x10] sm:$0xf]
    %v168 = vld [vmem:[%s5 + $0x14] sm:$0xf]
    %v169 = vld [vmem:[%s5 + $0x18] sm:$0xf]
    %v170 = vld [vmem:[%s5 + $0x1c] sm:$0xf]
    %v171 = vld [vmem:[%s5 + $0x20] sm:$0xf]
    %v172 = vld [vmem:[%s5 + $0x24] sm:$0xf]
    %v173 = vld [vmem:[%s5 + $0x28] sm:$0xf]
    %v174 = vld [vmem:[%s5 + $0x2c] sm:$0xf]
    %v175 = vld [vmem:[%s5 + $0x30] sm:$0xf]
    %v176 = vld [vmem:[%s5 + $0x34] sm:$0xf]
    %v177 = vld [vmem:[%s5 + $0x38] sm:$0xf]
    %v178 = vld [vmem:[%s5 + $0x3c] sm:$0xf]
    %v179 = vld [vmem:[%s6] sm:$0x1]
    %v181 = vlaneseq
    %v182 = vshrl.u32 %v181, 7
    %v183 = vsub.s32 0, %v182
    %v184 = vrot.slane %v179, %v183
    %v202 = vunpack.c.l.b16 %v163
    %v203 = vunpack.c.l.b16 %v164
    %v204 = vunpack.c.l.b16 %v165
    %v205 = vunpack.c.l.b16 %v166
    %v206 = vunpack.c.l.b16 %v167
    %v207 = vunpack.c.l.b16 %v168
    %v208 = vunpack.c.l.b16 %v169
    %v209 = vunpack.c.l.b16 %v170
    %v210 = vunpack.c.l.b16 %v171
    %v211 = vunpack.c.l.b16 %v172
    %v212 = vunpack.c.l.b16 %v173
    %v213 = vunpack.c.l.b16 %v174
    %v214 = vunpack.c.l.b16 %v175
    %v215 = vunpack.c.l.b16 %v176
    %v216 = vunpack.c.l.b16 %v177
    %v217 = vunpack.c.l.b16 %v178
    %v218 = vpack.c.b16 %v203, %v202
    %v219 = vpack.c.b16 %v205, %v204
    %v220 = vpack.c.b16 %v207, %v206
    %v221 = vpack.c.b16 %v209, %v208
    %v222 = vpack.c.b16 %v211, %v210
    %v223 = vpack.c.b16 %v213, %v212
    %v224 = vpack.c.b16 %v215, %v214
    %v225 = vpack.c.b16 %v217, %v216
    %234 = vmatprep.subr.bf16.mxu0 0
    %235 = vmatpush1.bf16.msra.mxu0 %v218
    %236 = vmatprep.subr.bf16.mxu0 0
    %237 = vmatpush1.bf16.msra.mxu0 %v219
    %238 = vmatprep.subr.bf16.mxu0 0
    %239 = vmatpush1.bf16.msra.mxu0 %v220
    %240 = vmatprep.subr.bf16.mxu0 0
    %241 = vmatpush1.bf16.msra.mxu0 %v221
    %242 = vmatprep.subr.bf16.mxu0 0
    %243 = vmatpush1.bf16.msra.mxu0 %v222
    %244 = vmatprep.subr.bf16.mxu0 0
    %245 = vmatpush1.bf16.msra.mxu0 %v223
    %246 = vmatprep.subr.bf16.mxu0 0
    %247 = vmatpush1.bf16.msra.mxu0 %v224
    %248 = vmatprep.subr.bf16.mxu0 0
    %249 = vmatpush1.bf16.msra.mxu0 %v225
    %250 = vmatprep.subr.bf16.mxu0 0
    %251 = vmatpush1.bf16.msra.mxu0 0
    %252 = vmatprep.subr.bf16.mxu0 0
    %253 = vmatpush1.bf16.msra.mxu0 0
    %254 = vmatprep.subr.bf16.mxu0 0
    %255 = vmatpush1.bf16.msra.mxu0 0
    %256 = vmatprep.subr.bf16.mxu0 0
    %257 = vmatpush1.bf16.msra.mxu0 0
    %258 = vmatprep.subr.bf16.mxu0 0
    %259 = vmatpush1.bf16.msra.mxu0 0
    %260 = vmatprep.subr.bf16.mxu0 0
    %261 = vmatpush1.bf16.msra.mxu0 0
    %262 = vmatprep.subr.bf16.mxu0 0
    %263 = vmatpush1.bf16.msra.mxu0 0
    %264 = vmatprep.subr.bf16.mxu0 0
    %265 = vmatpush1.bf16.msra.mxu0 0
    %266 = vmatprep.mubr.bf16.mxu0 0
    %267 = vmatmul.mubr.bf16.gmra.mrb[0].mxu0 %v162
    %v268 = vpop.f32.mrb[0].mxu0
    %v269 = vadd.f32 %v184, %v268
    %v270 = vpop.f32.mrb[0].mxu0
    %v271 = vpop.f32.mrb[0].mxu0
    %v272 = vpop.f32.mrb[0].mxu0
    %273 = vdwg.mxu0
    %v274 = vmax.f32 %v269, 0.0
    %v275 = vpack.c.bf16 %v274, %v274
    %v276 = vld [vmem:[%s7] sm:$0xf]
    %v277 = vld [vmem:[%s7 + $0x4] sm:$0xf]
    %v278 = vld [vmem:[%s7 + $0x8] sm:$0xf]
    %v279 = vld [vmem:[%s7 + $0xc] sm:$0xf]
    %v280 = vld [vmem:[%s7 + $0x10] sm:$0xf]
    %v281 = vld [vmem:[%s7 + $0x14] sm:$0xf]
    %v282 = vld [vmem:[%s7 + $0x18] sm:$0xf]
    %v283 = vld [vmem:[%s7 + $0x1c] sm:$0xf]
    %v284 = vld [vmem:[%s7 + $0x20] sm:$0xf]
    %v285 = vld [vmem:[%s7 + $0x24] sm:$0xf]
    %v286 = vld [vmem:[%s7 + $0x28] sm:$0xf]
    %v287 = vld [vmem:[%s7 + $0x2c] sm:$0xf]
    %v288 = vld [vmem:[%s7 + $0x30] sm:$0xf]
    %v289 = vld [vmem:[%s7 + $0x34] sm:$0xf]
    %v290 = vld [vmem:[%s7 + $0x38] sm:$0xf]
    %v291 = vld [vmem:[%s7 + $0x3c] sm:$0xf]
    %s292 = sld [smem:[#allocation2]]
    %v293 = vstv %s292
    %v310 = vunpack.c.l.b16 %v276
    %v311 = vunpack.c.l.b16 %v277
    %v312 = vunpack.c.l.b16 %v278
    %v313 = vunpack.c.l.b16 %v279
    %v314 = vunpack.c.l.b16 %v280
    %v315 = vunpack.c.l.b16 %v281
    %v316 = vunpack.c.l.b16 %v282
    %v317 = vunpack.c.l.b16 %v283
    %v318 = vunpack.c.l.b16 %v284
    %v319 = vunpack.c.l.b16 %v285
    %v320 = vunpack.c.l.b16 %v286
    %v321 = vunpack.c.l.b16 %v287
    %v322 = vunpack.c.l.b16 %v288
    %v323 = vunpack.c.l.b16 %v289
    %v324 = vunpack.c.l.b16 %v290
    %v325 = vunpack.c.l.b16 %v291
    %v326 = vpack.c.b16 %v311, %v310
    %v327 = vpack.c.b16 %v313, %v312
    %v328 = vpack.c.b16 %v315, %v314
    %v329 = vpack.c.b16 %v317, %v316
    %v330 = vpack.c.b16 %v319, %v318
    %v331 = vpack.c.b16 %v321, %v320
    %v332 = vpack.c.b16 %v323, %v322
    %v333 = vpack.c.b16 %v325, %v324
    %342 = vmatprep.subr.bf16.mxu0 0
    %343 = vmatpush1.bf16.msra.mxu0 %v326
    %344 = vmatprep.subr.bf16.mxu0 0
    %345 = vmatpush1.bf16.msra.mxu0 %v327
    %346 = vmatprep.subr.bf16.mxu0 0
    %347 = vmatpush1.bf16.msra.mxu0 %v328
    %348 = vmatprep.subr.bf16.mxu0 0
    %349 = vmatpush1.bf16.msra.mxu0 %v329
    %350 = vmatprep.subr.bf16.mxu0 0
    %351 = vmatpush1.bf16.msra.mxu0 %v330
    %352 = vmatprep.subr.bf16.mxu0 0
    %353 = vmatpush1.bf16.msra.mxu0 %v331
    %354 = vmatprep.subr.bf16.mxu0 0
    %355 = vmatpush1.bf16.msra.mxu0 %v332
    %356 = vmatprep.subr.bf16.mxu0 0
    %357 = vmatpush1.bf16.msra.mxu0 %v333
    %358 = vmatprep.subr.bf16.mxu0 0
    %359 = vmatpush1.bf16.msra.mxu0 0
    %360 = vmatprep.subr.bf16.mxu0 0
    %361 = vmatpush1.bf16.msra.mxu0 0
    %362 = vmatprep.subr.bf16.mxu0 0
    %363 = vmatpush1.bf16.msra.mxu0 0
    %364 = vmatprep.subr.bf16.mxu0 0
    %365 = vmatpush1.bf16.msra.mxu0 0
    %366 = vmatprep.subr.bf16.mxu0 0
    %367 = vmatpush1.bf16.msra.mxu0 0
    %368 = vmatprep.subr.bf16.mxu0 0
    %369 = vmatpush1.bf16.msra.mxu0 0
    %370 = vmatprep.subr.bf16.mxu0 0
    %371 = vmatpush1.bf16.msra.mxu0 0
    %372 = vmatprep.subr.bf16.mxu0 0
    %373 = vmatpush1.bf16.msra.mxu0 0
    %374 = vmatprep.mubr.bf16.mxu0 0
    %375 = vmatmul.mubr.bf16.gmra.mrb[0].mxu0 %v275
    %v376 = vpop.f32.mrb[0].mxu0
    %v377 = vadd.f32 %v293, %v376
    %v378 = vpop.f32.mrb[0].mxu0
    %v379 = vpop.f32.mrb[0].mxu0
    %v380 = vpop.f32.mrb[0].mxu0
    %381 = vdwg.mxu0
    %vm382 = vcmask 7168
    %383 = vst.msk [vmem:[%s9] sm:$0xff] %vm382, %v377
    // Predicated region
    $region42: #{tpu_custom_call.1} parent=1 // pred_check
      _
    $region43: #{tpu_custom_call.1} parent=1 // pred_check_branch
      %385 = sbr.rel (0) target = $region45
    $region44: #{tpu_custom_call.1} parent=1 // pred_region
      _
    $region45: #{tpu_custom_call.1} parent=1 // pred_fallthru
      _
    // Predicated region
    $region46: #{tpu_custom_call.1} parent=1 // pred_check
      _
    $region47: #{tpu_custom_call.1} parent=1 // pred_check_branch
      %387 = sbr.rel (0) target = $region49
    $region48: #{tpu_custom_call.1} parent=1 // pred_region
      _
    $region49: #{tpu_custom_call.1} parent=1 // pred_fallthru
      _
    %388 = vsyncpa [#allocation4], 1

</llo_original>
